<compile_context>
chip_gen: v7x
topology: tpu7x:2x2x1
jax: 0.10.0
libtpu: 0.0.40
codegen_flags: <defaults>
</compile_context>

<pallas_src>
import functools

import jax
import jax.numpy as jnp
from jax.experimental import pallas as pl
from jax.experimental.pallas import tpu as pltpu


def _round_up(x, m):
    return ((x + m - 1) // m) * m


def _pad2d(a, rows, cols):
    pr, pc = rows - a.shape[0], cols - a.shape[1]
    if pr == 0 and pc == 0:
        return a
    return jnp.pad(a, ((0, pr), (0, pc)))


def _vmem_capacity_bytes():
    try:
        return int(pltpu.get_tpu_info().vmem_capacity_bytes)
    except Exception:
        return 64 << 20  # conservative per-TensorCore value (v7x)


# ---------------------------------------------------------------------------
# Kernels
# ---------------------------------------------------------------------------
def ffn_resident_kernel(x_ref, w1_ref, b1_ref, w2_ref, b2_ref, o_ref):
    # Weights have a constant block index -> fetched from HBM once, resident.
    h = jnp.dot(x_ref[...], w1_ref[...], preferred_element_type=jnp.float32)
    h = jnp.maximum(h + b1_ref[...], 0.0)
    # TODO(synk): dropout omitted (identity in eval mode); training would need
    #             pltpu.prng_seed / pltpu.prng_random_bits masking here.
    y = jnp.dot(h.astype(w2_ref.dtype), w2_ref[...],
                preferred_element_type=jnp.float32)
    o_ref[...] = (y + b2_ref[...]).astype(o_ref.dtype)


def ffn_chunked_kernel(x_ref, w1_ref, b1_ref, w2_ref, b2_ref, o_ref, acc_ref):
    # x_ref : (tm, d_model_p)   w1_ref: (d_model_p, tf)   b1_ref: (1, tf)  f32
    # w2_ref: (tf, d_out_p)     b2_ref: (1, d_out_p) f32
    # o_ref : (tm, d_out_p)     acc_ref: (tm, d_out_p) f32 scratch
    f = pl.program_id(1)

    @pl.when(f == 0)
    def _init():
        acc_ref[...] = jnp.broadcast_to(b2_ref[...], acc_ref.shape)

    h = jnp.dot(x_ref[...], w1_ref[...], preferred_element_type=jnp.float32)
    h = jnp.maximum(h + b1_ref[...], 0.0)
    acc_ref[...] += jnp.dot(h.astype(w2_ref.dtype), w2_ref[...],
                            preferred_element_type=jnp.float32)

    @pl.when(f == pl.num_programs(1) - 1)
    def _finalize():
        o_ref[...] = acc_ref[...].astype(o_ref.dtype)


# ---------------------------------------------------------------------------
# VMEM planning
# ---------------------------------------------------------------------------
def _resident_bytes(tm, dmp, dfp, dop, cb, ob):
    # Double-buffered blocks + compiler temps (f32 h + bf16 cast + f32 y).
    blocks = 2 * (tm * dmp * cb + dmp * dfp * cb + dfp * 4
                  + dfp * dop * cb + dop * 4 + tm * dop * ob)
    temps = tm * dfp * (4 + cb) + tm * dop * 4
    return blocks + temps


def _chunked_bytes(tm, tf, dmp, dop, cb, ob):
    # Double-buffered blocks + f32 acc scratch + h temp (f32 + cast) + dot out.
    blocks = 2 * (tm * dmp * cb + dmp * tf * cb + tf * 4
                  + tf * dop * cb + dop * 4 + tm * dop * ob)
    temps = tm * tf * (4 + cb) + 2 * tm * dop * 4
    return blocks + temps


def _plan_tiles(n, d_ff, dmp, dop, cb, ob, budget, tm_req, tf_req):
    n_cap = max(_round_up(max(n, 1), 128), 128)
    if tm_req is not None:
        tm_list = [min(_round_up(tm_req, 128), n_cap)]
    else:
        tm_list = [t for t in (1024, 512, 256, 128) if t <= n_cap] or [n_cap]
    dff128 = _round_up(d_ff, 128)

    # Preferred: weights resident in VMEM, fetched from HBM exactly once.
    if tf_req is None:
        fitting = [t for t in tm_list
                   if _resident_bytes(t, dmp, dff128, dop, cb, ob) <= budget]
        if fitting:
            # Prefer >= 2 row tiles so the "parallel" axis can shard across
            # the two TensorCores on v7x.
            multi = [t for t in fitting if n_cap >= 2 * t]
            return "resident", (multi[0] if multi else fitting[0]), dff128

    # Fallback: chunk d_ff (reduction grid axis + f32 accumulator).
    if tf_req is not None:
        tf_list = [min(_round_up(tf_req, 128), dff128)]
    else:
        tf_list = [t for t in (2048, 1024, 512, 256, 128) if t <= dff128] or [dff128]
    for tm in tm_list:           # largest tm first: maximizes weight reuse
        for tf in tf_list:       # then largest tf: fewest accumulator RMWs
            if _chunked_bytes(tm, tf, dmp, dop, cb, ob) <= budget:
                return "chunked", tm, tf
    return "chunked", tm_list[-1], tf_list[-1]


# ---------------------------------------------------------------------------
# Wrapper
# ---------------------------------------------------------------------------
@functools.partial(jax.jit, static_argnames=("tm", "tf", "compute_dtype"))
def positionwise_feed_forward(x, w1, b1, w2, b2, *, tm=None, tf=None,
                              compute_dtype=jnp.bfloat16):
    """x: (..., d_model). w1: (d_model, d_ff), w2: (d_ff, d_out) (already (in,out)).

    tm: row tile (multiple of 128) or None for auto.
    tf: d_ff chunk (multiple of 128) or None for auto; setting tf forces the
        chunked-reduction path.
    compute_dtype: matmul input dtype (default bf16; accumulation stays f32).
    """
    orig_dtype = x.dtype
    *lead, d_model = x.shape
    d_ff, d_out = w1.shape[1], w2.shape[1]
    n = 1
    for s in lead:
        n *= int(s)

    if compute_dtype is not None:
        x = x.astype(compute_dtype)
        w1 = w1.astype(compute_dtype)
        w2 = w2.astype(compute_dtype)
    # Biases stay f32: they are applied on the f32 accumulator path.
    b1 = b1.astype(jnp.float32)
    b2 = b2.astype(jnp.float32)

    cbytes = jnp.dtype(x.dtype).itemsize
    obytes = jnp.dtype(orig_dtype).itemsize

    # Lane-dense padding targets (multiples of 128).
    d_model_p = _round_up(d_model, 128)
    d_out_p = _round_up(d_out, 128)

    # VMEM budgeting clamped to the actual chip capacity (v7x has only 64 MiB).
    vmem_cap = _vmem_capacity_bytes()
    vmem_ceiling = max(vmem_cap - (4 << 20), 32 << 20)
    budget = max(vmem_ceiling - (4 << 20), 16 << 20)

    mode, tm_e, tf_e = _plan_tiles(n, d_ff, d_model_p, d_out_p,
                                   cbytes, obytes, budget, tm, tf)
    d_ff_p = tf_e if mode == "resident" else _round_up(d_ff, tf_e)

    n_p = _round_up(max(n, 1), tm_e)
    n_row_tiles = n_p // tm_e

    # Pad (no-op copies are skipped when pad widths are zero).
    # TODO(synk): for repeated calls, pre-pad/pre-cast the weights once at
    #             load time instead of on every invocation.
    x2d = _pad2d(x.reshape(n, d_model), n_p, d_model_p)
    w1p = _pad2d(w1, d_model_p, d_ff_p)
    b1p = _pad2d(b1.reshape(1, d_ff), 1, d_ff_p)
    w2p = _pad2d(w2, d_ff_p, d_out_p)
    b2p = _pad2d(b2.reshape(1, d_out), 1, d_out_p)

    if mode == "resident":
        grid = (n_row_tiles,)
        in_specs = [
            pl.BlockSpec((tm_e, d_model_p), lambda i: (i, 0)),      # x tile
            pl.BlockSpec((d_model_p, d_ff_p), lambda i: (0, 0)),    # w1 resident
            pl.BlockSpec((1, d_ff_p), lambda i: (0, 0)),            # b1 resident
            pl.BlockSpec((d_ff_p, d_out_p), lambda i: (0, 0)),      # w2 resident
            pl.BlockSpec((1, d_out_p), lambda i: (0, 0)),           # b2 resident
        ]
        out_specs = pl.BlockSpec((tm_e, d_out_p), lambda i: (i, 0))
        scratch_shapes = []
        kernel = ffn_resident_kernel
        dim_sem = ("parallel",)
        need = _resident_bytes(tm_e, d_model_p, d_ff_p, d_out_p, cbytes, obytes)
        weight_fetches = 1
    else:
        grid = (n_row_tiles, d_ff_p // tf_e)   # rows parallel, d_ff reduction last
        in_specs = [
            pl.BlockSpec((tm_e, d_model_p), lambda i, f: (i, 0)),   # x tile
            pl.BlockSpec((d_model_p, tf_e), lambda i, f: (0, f)),   # w1 chunk
            pl.BlockSpec((1, tf_e), lambda i, f: (0, f)),           # b1 chunk
            pl.BlockSpec((tf_e, d_out_p), lambda i, f: (f, 0)),     # w2 chunk
            pl.BlockSpec((1, d_out_p), lambda i, f: (0, 0)),        # b2
        ]
        out_specs = pl.BlockSpec((tm_e, d_out_p), lambda i, f: (i, 0))
        scratch_shapes = [pltpu.VMEM((tm_e, d_out_p), jnp.float32)]
        kernel = ffn_chunked_kernel
        dim_sem = ("parallel", "arbitrary")
        need = _chunked_bytes(tm_e, tf_e, d_model_p, d_out_p, cbytes, obytes)
        weight_fetches = n_row_tiles

    vmem_limit = int(min(max(need + (4 << 20), 32 << 20), vmem_ceiling))

    weight_bytes = ((d_model_p * d_ff_p + d_ff_p * d_out_p) * cbytes
                    + (d_ff_p + d_out_p) * 4)
    cost = pl.CostEstimate(
        flops=2 * n_p * d_ff_p * (d_model_p + d_out_p),
        transcendentals=0,
        bytes_accessed=(n_p * d_model_p * cbytes
                        + weight_fetches * weight_bytes
                        + n_p * d_out_p * obytes),
    )

    out = pl.pallas_call(
        kernel,
        out_shape=jax.ShapeDtypeStruct((n_p, d_out_p), orig_dtype),
        grid_spec=pltpu.PrefetchScalarGridSpec(
            num_scalar_prefetch=0,
            grid=grid,
            in_specs=in_specs,
            out_specs=out_specs,
            scratch_shapes=scratch_shapes,
        ),
        compiler_params=pltpu.CompilerParams(
            dimension_semantics=dim_sem,
            vmem_limit_bytes=vmem_limit),
        cost_estimate=cost,
    )(x2d, w1p, b1p, w2p, b2p)

    # Padded rows/cols hold garbage from relu(b1)@w2+b2; slice them off here.
    return out[:n, :d_out].reshape(*lead, d_out)


# ---------------------------------------------------------------------------
# Reference & test
# ---------------------------------------------------------------------------
def _reference(x, w1, b1, w2, b2):
    h = jnp.maximum(jnp.einsum("bsd,df->bsf", x, w1) + b1, 0.0)
    return jnp.einsum("bsf,fo->bso", h, w2) + b2


if __name__ == "__main__":
    # Small shapes consistent with the module's forward.
    batch, seq = 2, 8
    d_model, d_ff, d_out = 32, 64, 32

    key = jax.random.PRNGKey(0)
    kx, k1, k2, k3, k4 = jax.random.split(key, 5)

    x = jax.random.normal(kx, (batch, seq, d_model), dtype=jnp.float32)
    # PyTorch Linear weight is (out, in); stored here already transposed to
    # (in, out) for the kernel.
    w1 = jax.random.normal(k1, (d_model, d_ff), dtype=jnp.float32) * 0.05
    b1 = jax.random.normal(k2, (d_ff,), dtype=jnp.float32) * 0.05
    w2 = jax.random.normal(k3, (d_ff, d_out), dtype=jnp.float32) * 0.05
    b2 = jax.random.normal(k4, (d_out,), dtype=jnp.float32) * 0.05

    y_ref = _reference(x, w1, b1, w2, b2)

    # f32 compute path (resident-weights kernel; tight-ish tolerance).
    y_f32 = positionwise_feed_forward(x, w1, b1, w2, b2,
                                      compute_dtype=jnp.float32)
    y_f32 = jax.block_until_ready(y_f32)
    assert y_f32.shape == (batch, seq, d_out)
    assert jnp.allclose(y_f32, y_ref, atol=1e-4, rtol=1e-4), "f32 mismatch vs reference"

    # Default perf path: bf16 matmul inputs, f32 accumulation (loose tolerance).
    y_bf16 = positionwise_feed_forward(x, w1, b1, w2, b2)
    y_bf16 = jax.block_until_ready(y_bf16)
    assert jnp.allclose(y_bf16, y_ref, atol=5e-2, rtol=5e-2), "bf16 mismatch vs reference"

    # Explicitly exercise the chunked-reduction fallback (tf forces chunking).
    y_chunk = positionwise_feed_forward(x, w1, b1, w2, b2, tm=128, tf=128,
                                        compute_dtype=jnp.float32)
    y_chunk = jax.block_until_ready(y_chunk)
    assert jnp.allclose(y_chunk, y_ref, atol=1e-4, rtol=1e-4), "chunked mismatch vs reference"

    print("KERNEL_OK")
</pallas_src>

<mosaic_0001>
module attributes {stable_mosaic.version = 11 : i64} {
  func.func @ffn_resident_kernel(%arg0: i32, %arg1: memref<128x128xf32, #tpu.memory_space<vmem>>, %arg2: memref<128x128xf32, #tpu.memory_space<vmem>>, %arg3: memref<1x128xf32, #tpu.memory_space<vmem>>, %arg4: memref<128x128xf32, #tpu.memory_space<vmem>>, %arg5: memref<1x128xf32, #tpu.memory_space<vmem>>, %arg6: memref<128x128xf32, #tpu.memory_space<vmem>>) attributes {dimension_semantics = [#tpu.dimension_semantics<parallel>], iteration_bounds = array<i64: 1>, scalar_prefetch = 0 : i64, scratch_operands = 0 : i64, tpu.core_type = #tpu.core_type<tc>, window_params = [{transform_indices = @transform_0, window_bounds = array<i64: 128, 128>}, {pipeline_mode = #tpu.pipeline_mode<synchronous>, transform_indices = @transform_1, window_bounds = array<i64: 128, 128>}, {pipeline_mode = #tpu.pipeline_mode<synchronous>, transform_indices = @transform_2, window_bounds = array<i64: 1, 128>}, {pipeline_mode = #tpu.pipeline_mode<synchronous>, transform_indices = @transform_3, window_bounds = array<i64: 128, 128>}, {pipeline_mode = #tpu.pipeline_mode<synchronous>, transform_indices = @transform_4, window_bounds = array<i64: 1, 128>}, {transform_indices = @transform_5, window_bounds = array<i64: 128, 128>}]} {
    %c0 = arith.constant 0 : index
    %c0_0 = arith.constant 0 : index
    %0 = vector.load %arg1[%c0, %c0_0] : memref<128x128xf32, #tpu.memory_space<vmem>>, vector<128x128xf32>
    %c0_1 = arith.constant 0 : index
    %c0_2 = arith.constant 0 : index
    %1 = vector.load %arg2[%c0_1, %c0_2] : memref<128x128xf32, #tpu.memory_space<vmem>>, vector<128x128xf32>
    %cst = arith.constant dense<0.000000e+00> : vector<128x128xf32>
    %2 = tpu.matmul %0, %1, %cst {dimension_numbers = #tpu.dot_dimension_numbers<[1], [0], [0], [1], [0, 0, 1, 1], [], []>} : vector<128x128xf32>, vector<128x128xf32>, vector<128x128xf32> -> vector<128x128xf32>
    %c0_3 = arith.constant 0 : index
    %c0_4 = arith.constant 0 : index
    %3 = vector.load %arg3[%c0_3, %c0_4] : memref<1x128xf32, #tpu.memory_space<vmem>>, vector<1x128xf32>
    %4 = vector.broadcast %3 : vector<1x128xf32> to vector<128x128xf32>
    %5 = arith.addf %2, %4 : vector<128x128xf32>
    %cst_5 = arith.constant 0.000000e+00 : f32
    %6 = vector.broadcast %cst_5 : f32 to vector<128x128xf32>
    %7 = arith.maximumf %5, %6 : vector<128x128xf32>
    %c0_6 = arith.constant 0 : index
    %c0_7 = arith.constant 0 : index
    %8 = vector.load %arg4[%c0_6, %c0_7] : memref<128x128xf32, #tpu.memory_space<vmem>>, vector<128x128xf32>
    %cst_8 = arith.constant dense<0.000000e+00> : vector<128x128xf32>
    %9 = tpu.matmul %7, %8, %cst_8 {dimension_numbers = #tpu.dot_dimension_numbers<[1], [0], [0], [1], [0, 0, 1, 1], [], []>} : vector<128x128xf32>, vector<128x128xf32>, vector<128x128xf32> -> vector<128x128xf32>
    %c0_9 = arith.constant 0 : index
    %c0_10 = arith.constant 0 : index
    %10 = vector.load %arg5[%c0_9, %c0_10] : memref<1x128xf32, #tpu.memory_space<vmem>>, vector<1x128xf32>
    %11 = vector.broadcast %10 : vector<1x128xf32> to vector<128x128xf32>
    %12 = arith.addf %9, %11 : vector<128x128xf32>
    %c0_11 = arith.constant 0 : index
    %c0_12 = arith.constant 0 : index
    %13 = vector.load %arg6[%c0_11, %c0_12] : memref<128x128xf32, #tpu.memory_space<vmem>>, vector<128x128xf32>
    tpu.vector_store %arg6[%c0_11, %c0_12], %12 {strides = array<i32>} : memref<128x128xf32, #tpu.memory_space<vmem>>, vector<128x128xf32>,
    return
  }
  func.func @transform_0(%arg0: i32) -> (i32, i32) {
    %c0_i32 = arith.constant 0 : i32
    %c0_i32_0 = arith.constant 0 : i32
    return %arg0, %c0_i32 : i32, i32
  }
  func.func @transform_1(%arg0: i32) -> (i32, i32) {
    %c0_i32 = arith.constant 0 : i32
    %c0_i32_0 = arith.constant 0 : i32
    %c0_i32_1 = arith.constant 0 : i32
    return %c0_i32, %c0_i32_0 : i32, i32
  }
  func.func @transform_2(%arg0: i32) -> (i32, i32) {
    %c0_i32 = arith.constant 0 : i32
    %c0_i32_0 = arith.constant 0 : i32
    %c0_i32_1 = arith.constant 0 : i32
    return %c0_i32, %c0_i32_0 : i32, i32
  }
  func.func @transform_3(%arg0: i32) -> (i32, i32) {
    %c0_i32 = arith.constant 0 : i32
    %c0_i32_0 = arith.constant 0 : i32
    %c0_i32_1 = arith.constant 0 : i32
    return %c0_i32, %c0_i32_0 : i32, i32
  }
  func.func @transform_4(%arg0: i32) -> (i32, i32) {
    %c0_i32 = arith.constant 0 : i32
    %c0_i32_0 = arith.constant 0 : i32
    %c0_i32_1 = arith.constant 0 : i32
    return %c0_i32, %c0_i32_0 : i32, i32
  }
  func.func @transform_5(%arg0: i32) -> (i32, i32) {
    %c0_i32 = arith.constant 0 : i32
    %c0_i32_0 = arith.constant 0 : i32
    return %arg0, %c0_i32 : i32, i32
  }
}

</mosaic_0001>

<llo_original>
// kernel: positionwise_feed_forward.1
$region0: #{positionwise_feed_forward.1}
  #allocation0 [shape = 'u32[]', space=smem, size = 0x4, offset = 0x4, fixed_abs, tag = 'smem constant byte address 0x4 - core index']
  #allocation1 [shape = 'u32[144,128]{1,0:T(1,128)}', space=vmem, size = 0x12000, scoped, tag = 'internal scratch']
  %s0 = inlined_call_operand.vmem [shape: f32[128,128], index: 0, kind: input, shape index: {}]
  %s1 = inlined_call_operand.vmem [shape: f32[128,128], index: 1, kind: input, shape index: {}]
  %s2 = inlined_call_operand.vmem [shape: f32[1,128], index: 2, kind: input, shape index: {}]
  %s3 = inlined_call_operand.vmem [shape: f32[128,128], index: 3, kind: input, shape index: {}]
  %s4 = inlined_call_operand.vmem [shape: f32[1,128], index: 4, kind: input, shape index: {}]
  %s5 = inlined_call_operand.vmem [shape: f32[128,128], index: 5, kind: output, shape index: {}]
  %s6 = sld [smem:[#allocation0]]
  $region30: #{positionwise_feed_forward.1} parent=0
    _
  %s8 = ssub.s32 1, %s6
  %s9 = scalar_select 0, %s8, %s6
  // Predicated region
  $region2: #{positionwise_feed_forward.1} parent=0 // pred_check
    _
  $region3: #{positionwise_feed_forward.1} parent=0 // pred_check_branch
    %11 = sbr.rel (0) target = $region5
  $region4: #{positionwise_feed_forward.1} parent=0 // pred_region
    _
  $region5: #{positionwise_feed_forward.1} parent=0 // pred_fallthru
    _
  // Predicated region
  $region6: #{positionwise_feed_forward.1} parent=0 // pred_check
    _
  $region7: #{positionwise_feed_forward.1} parent=0 // pred_check_branch
    %13 = sbr.rel (0) target = $region9
  $region8: #{positionwise_feed_forward.1} parent=0 // pred_region
    _
  $region9: #{positionwise_feed_forward.1} parent=0 // pred_fallthru
    _
  // Predicated region
  $region10: #{positionwise_feed_forward.1} parent=0 // pred_check
    _
  $region11: #{positionwise_feed_forward.1} parent=0 // pred_check_branch
    %15 = sbr.rel (0) target = $region13
  $region12: #{positionwise_feed_forward.1} parent=0 // pred_region
    _
  $region13: #{positionwise_feed_forward.1} parent=0 // pred_fallthru
    _
  // Predicated region
  $region14: #{positionwise_feed_forward.1} parent=0 // pred_check
    _
  $region15: #{positionwise_feed_forward.1} parent=0 // pred_check_branch
    %17 = sbr.rel (0) target = $region17
  $region16: #{positionwise_feed_forward.1} parent=0 // pred_region
    _
  $region17: #{positionwise_feed_forward.1} parent=0 // pred_fallthru
    _
  // Predicated region
  $region18: #{positionwise_feed_forward.1} parent=0 // pred_check
    _
  $region19: #{positionwise_feed_forward.1} parent=0 // pred_check_branch
    %19 = sbr.rel (0) target = $region21
  $region20: #{positionwise_feed_forward.1} parent=0 // pred_region
    _
  $region21: #{positionwise_feed_forward.1} parent=0 // pred_fallthru
    _
  %v20 = vld [vmem:[%s0] sm:$0xff]
  %v21 = vld [vmem:[%s0 + $0x8] sm:$0xff]
  %v22 = vld [vmem:[%s0 + $0x10] sm:$0xff]
  %v23 = vld [vmem:[%s0 + $0x18] sm:$0xff]
  %v24 = vld [vmem:[%s0 + $0x20] sm:$0xff]
  %v25 = vld [vmem:[%s0 + $0x28] sm:$0xff]
  %v26 = vld [vmem:[%s0 + $0x30] sm:$0xff]
  %v27 = vld [vmem:[%s0 + $0x38] sm:$0xff]
  %v28 = vld [vmem:[%s0 + $0x40] sm:$0xff]
  %v29 = vld [vmem:[%s0 + $0x48] sm:$0xff]
  %v30 = vld [vmem:[%s0 + $0x50] sm:$0xff]
  %v31 = vld [vmem:[%s0 + $0x58] sm:$0xff]
  %v32 = vld [vmem:[%s0 + $0x60] sm:$0xff]
  %v33 = vld [vmem:[%s0 + $0x68] sm:$0xff]
  %v34 = vld [vmem:[%s0 + $0x70] sm:$0xff]
  %v35 = vld [vmem:[%s0 + $0x78] sm:$0xff]
  %v36 = vld [vmem:[%s1] sm:$0xff]
  %v37 = vld [vmem:[%s1 + $0x8] sm:$0xff]
  %v38 = vld [vmem:[%s1 + $0x10] sm:$0xff]
  %v39 = vld [vmem:[%s1 + $0x18] sm:$0xff]
  %v40 = vld [vmem:[%s1 + $0x20] sm:$0xff]
  %v41 = vld [vmem:[%s1 + $0x28] sm:$0xff]
  %v42 = vld [vmem:[%s1 + $0x30] sm:$0xff]
  %v43 = vld [vmem:[%s1 + $0x38] sm:$0xff]
  %v44 = vld [vmem:[%s1 + $0x40] sm:$0xff]
  %v45 = vld [vmem:[%s1 + $0x48] sm:$0xff]
  %v46 = vld [vmem:[%s1 + $0x50] sm:$0xff]
  %v47 = vld [vmem:[%s1 + $0x58] sm:$0xff]
  %v48 = vld [vmem:[%s1 + $0x60] sm:$0xff]
  %v49 = vld [vmem:[%s1 + $0x68] sm:$0xff]
  %v50 = vld [vmem:[%s1 + $0x70] sm:$0xff]
  %v51 = vld [vmem:[%s1 + $0x78] sm:$0xff]
  %v52 = vld [vmem:[%s2] sm:$0x1]
  %v54 = vlaneseq
  %v55 = vshrl.u32 %v54, 7
  %v56 = vsub.s32 0, %v55
  %v57 = vrot.slane %v52, %v56
  %59 = vmatprep.subr.mxu0 0.0
  %60 = vmatpush1.msra.mxu0 %v36
  %61 = vmatprep.subr.mxu0 0.0
  %62 = vmatpush1.msra.mxu0 %v37
  %63 = vmatprep.subr.mxu0 0.0
  %64 = vmatpush1.msra.mxu0 %v38
  %65 = vmatprep.subr.mxu0 0.0
  %66 = vmatpush1.msra.mxu0 %v39
  %67 = vmatprep.subr.mxu0 0.0
  %68 = vmatpush1.msra.mxu0 %v40
  %69 = vmatprep.subr.mxu0 0.0
  %70 = vmatpush1.msra.mxu0 %v41
  %71 = vmatprep.subr.mxu0 0.0
  %72 = vmatpush1.msra.mxu0 %v42
  %73 = vmatprep.subr.mxu0 0.0
  %74 = vmatpush1.msra.mxu0 %v43
  %75 = vmatprep.subr.mxu0 0.0
  %76 = vmatpush1.msra.mxu0 %v44
  %77 = vmatprep.subr.mxu0 0.0
  %78 = vmatpush1.msra.mxu0 %v45
  %79 = vmatprep.subr.mxu0 0.0
  %80 = vmatpush1.msra.mxu0 %v46
  %81 = vmatprep.subr.mxu0 0.0
  %82 = vmatpush1.msra.mxu0 %v47
  %83 = vmatprep.subr.mxu0 0.0
  %84 = vmatpush1.msra.mxu0 %v48
  %85 = vmatprep.subr.mxu0 0.0
  %86 = vmatpush1.msra.mxu0 %v49
  %87 = vmatprep.subr.mxu0 0.0
  %88 = vmatpush1.msra.mxu0 %v50
  %89 = vmatprep.subr.mxu0 0.0
  %90 = vmatpush1.msra.mxu0 %v51
  %91 = vmatprep.subr.mxu0 0.0
  %92 = vmatpush1.msra.mxu0 0.0
  %93 = vmatprep.subr.mxu0 0.0
  %94 = vmatpush1.msra.mxu0 0.0
  %95 = vmatprep.subr.mxu0 0.0
  %96 = vmatpush1.msra.mxu0 0.0
  %97 = vmatprep.subr.mxu0 0.0
  %98 = vmatpush1.msra.mxu0 0.0
  %99 = vmatprep.subr.mxu0 0.0
  %100 = vmatpush1.msra.mxu0 0.0
  %101 = vmatprep.subr.mxu0 0.0
  %102 = vmatpush1.msra.mxu0 0.0
  %103 = vmatprep.subr.mxu0 0.0
  %104 = vmatpush1.msra.mxu0 0.0
  %105 = vmatprep.subr.mxu0 0.0
  %106 = vmatpush1.msra.mxu0 0.0
  %107 = vmatprep.subr.mxu0 0.0
  %108 = vmatpush1.msra.mxu0 0.0
  %109 = vmatprep.subr.mxu0 0.0
  %110 = vmatpush1.msra.mxu0 0.0
  %111 = vmatprep.subr.mxu0 0.0
  %112 = vmatpush1.msra.mxu0 0.0
  %113 = vmatprep.subr.mxu0 0.0
  %114 = vmatpush1.msra.mxu0 0.0
  %115 = vmatprep.subr.mxu0 0.0
  %116 = vmatpush1.msra.mxu0 0.0
  %117 = vmatprep.subr.mxu0 0.0
  %118 = vmatpush1.msra.mxu0 0.0
  %119 = vmatprep.subr.mxu0 0.0
  %120 = vmatpush1.msra.mxu0 0.0
  %121 = vmatprep.subr.mxu0 0.0
  %122 = vmatpush1.msra.mxu0 0.0
  %123 = vmatprep.mubr.f32.mxu0 0.0
  %124 = vmatmul.mubr.f32.gmra.mrb[0].mxu0 %v20
  %v125 = vpop.f32.mrb[0].mxu0
  %v126 = vadd.f32 %v57, %v125
  %v127 = vpop.f32.mrb[0].mxu0
  %128 = vmatprep.mubr.f32.mxu0 0.0
  %129 = vmatmul.mubr.f32.gmra.mrb[0].mxu0 %v21
  %v130 = vpop.f32.mrb[0].mxu0
  %v131 = vadd.f32 %v57, %v130
  %v132 = vpop.f32.mrb[0].mxu0
  %133 = vmatprep.mubr.f32.mxu0 0.0
  %134 = vmatmul.mubr.f32.gmra.mrb[0].mxu0 %v22
  %v135 = vpop.f32.mrb[0].mxu0
  %v136 = vadd.f32 %v57, %v135
  %v137 = vpop.f32.mrb[0].mxu0
  %138 = vmatprep.mubr.f32.mxu0 0.0
  %139 = vmatmul.mubr.f32.gmra.mrb[0].mxu0 %v23
  %v140 = vpop.f32.mrb[0].mxu0
  %v141 = vadd.f32 %v57, %v140
  %v142 = vpop.f32.mrb[0].mxu0
  %143 = vmatprep.mubr.f32.mxu0 0.0
  %144 = vmatmul.mubr.f32.gmra.mrb[0].mxu0 %v24
  %v145 = vpop.f32.mrb[0].mxu0
  %v146 = vadd.f32 %v57, %v145
  %v147 = vpop.f32.mrb[0].mxu0
  %148 = vmatprep.mubr.f32.mxu0 0.0
  %149 = vmatmul.mubr.f32.gmra.mrb[0].mxu0 %v25
  %v150 = vpop.f32.mrb[0].mxu0
  %v151 = vadd.f32 %v57, %v150
  %v152 = vpop.f32.mrb[0].mxu0
  %153 = vmatprep.mubr.f32.mxu0 0.0
  %154 = vmatmul.mubr.f32.gmra.mrb[0].mxu0 %v26
  %v155 = vpop.f32.mrb[0].mxu0
  %v156 = vadd.f32 %v57, %v155
  %v157 = vpop.f32.mrb[0].mxu0
  %158 = vmatprep.mubr.f32.mxu0 0.0
  %159 = vmatmul.mubr.f32.gmra.mrb[0].mxu0 %v27
  %v160 = vpop.f32.mrb[0].mxu0
  %v161 = vadd.f32 %v57, %v160
  %v162 = vpop.f32.mrb[0].mxu0
  %163 = vmatprep.mubr.f32.mxu0 0.0
  %164 = vmatmul.mubr.f32.gmra.mrb[0].mxu0 %v28
  %v165 = vpop.f32.mrb[0].mxu0
  %v166 = vadd.f32 %v57, %v165
  %v167 = vpop.f32.mrb[0].mxu0
  %168 = vmatprep.mubr.f32.mxu0 0.0
  %169 = vmatmul.mubr.f32.gmra.mrb[0].mxu0 %v29
  %v170 = vpop.f32.mrb[0].mxu0
  %v171 = vadd.f32 %v57, %v170
  %v172 = vpop.f32.mrb[0].mxu0
  %173 = vmatprep.mubr.f32.mxu0 0.0
  %174 = vmatmul.mubr.f32.gmra.mrb[0].mxu0 %v30
  %v175 = vpop.f32.mrb[0].mxu0
  %v176 = vadd.f32 %v57, %v175
  %v177 = vpop.f32.mrb[0].mxu0
  %178 = vmatprep.mubr.f32.mxu0 0.0
  %179 = vmatmul.mubr.f32.gmra.mrb[0].mxu0 %v31
  %v180 = vpop.f32.mrb[0].mxu0
  %v181 = vadd.f32 %v57, %v180
  %v182 = vpop.f32.mrb[0].mxu0
  %183 = vmatprep.mubr.f32.mxu0 0.0
  %184 = vmatmul.mubr.f32.gmra.mrb[0].mxu0 %v32
  %v185 = vpop.f32.mrb[0].mxu0
  %v186 = vadd.f32 %v57, %v185
  %v187 = vpop.f32.mrb[0].mxu0
  %188 = vmatprep.mubr.f32.mxu0 0.0
  %189 = vmatmul.mubr.f32.gmra.mrb[0].mxu0 %v33
  %v190 = vpop.f32.mrb[0].mxu0
  %v191 = vadd.f32 %v57, %v190
  %v192 = vpop.f32.mrb[0].mxu0
  %193 = vmatprep.mubr.f32.mxu0 0.0
  %194 = vmatmul.mubr.f32.gmra.mrb[0].mxu0 %v34
  %v195 = vpop.f32.mrb[0].mxu0
  %v196 = vadd.f32 %v57, %v195
  %v197 = vpop.f32.mrb[0].mxu0
  %198 = vmatprep.mubr.f32.mxu0 0.0
  %199 = vmatmul.mubr.f32.gmra.mrb[0].mxu0 %v35
  %v200 = vpop.f32.mrb[0].mxu0
  %v201 = vadd.f32 %v57, %v200
  %v202 = vpop.f32.mrb[0].mxu0
  %203 = vdwg.mxu0
  %v204 = vmax.f32 %v126, 0.0
  %v205 = vmax.f32 %v131, 0.0
  %v206 = vmax.f32 %v136, 0.0
  %v207 = vmax.f32 %v141, 0.0
  %v208 = vmax.f32 %v146, 0.0
  %v209 = vmax.f32 %v151, 0.0
  %v210 = vmax.f32 %v156, 0.0
  %v211 = vmax.f32 %v161, 0.0
  %v212 = vmax.f32 %v166, 0.0
  %v213 = vmax.f32 %v171, 0.0
  %v214 = vmax.f32 %v176, 0.0
  %v215 = vmax.f32 %v181, 0.0
  %v216 = vmax.f32 %v186, 0.0
  %v217 = vmax.f32 %v191, 0.0
  %v218 = vmax.f32 %v196, 0.0
  %v219 = vmax.f32 %v201, 0.0
  %v220 = vld [vmem:[%s3] sm:$0xff]
  %v221 = vld [vmem:[%s3 + $0x8] sm:$0xff]
  %v222 = vld [vmem:[%s3 + $0x10] sm:$0xff]
  %v223 = vld [vmem:[%s3 + $0x18] sm:$0xff]
  %v224 = vld [vmem:[%s3 + $0x20] sm:$0xff]
  %v225 = vld [vmem:[%s3 + $0x28] sm:$0xff]
  %v226 = vld [vmem:[%s3 + $0x30] sm:$0xff]
  %v227 = vld [vmem:[%s3 + $0x38] sm:$0xff]
  %v228 = vld [vmem:[%s3 + $0x40] sm:$0xff]
  %v229 = vld [vmem:[%s3 + $0x48] sm:$0xff]
  %v230 = vld [vmem:[%s3 + $0x50] sm:$0xff]
  %v231 = vld [vmem:[%s3 + $0x58] sm:$0xff]
  %v232 = vld [vmem:[%s3 + $0x60] sm:$0xff]
  %v233 = vld [vmem:[%s3 + $0x68] sm:$0xff]
  %v234 = vld [vmem:[%s3 + $0x70] sm:$0xff]
  %v235 = vld [vmem:[%s3 + $0x78] sm:$0xff]
  %v236 = vld [vmem:[%s4] sm:$0x1]
  %v238 = vlaneseq
  %v239 = vshrl.u32 %v238, 7
  %v240 = vsub.s32 0, %v239
  %v241 = vrot.slane %v236, %v240
  %243 = vmatprep.subr.mxu0 0.0
  %244 = vmatpush1.msra.mxu0 %v220
  %245 = vmatprep.subr.mxu0 0.0
  %246 = vmatpush1.msra.mxu0 %v221
  %247 = vmatprep.subr.mxu0 0.0
  %248 = vmatpush1.msra.mxu0 %v222
  %249 = vmatprep.subr.mxu0 0.0
  %250 = vmatpush1.msra.mxu0 %v223
  %251 = vmatprep.subr.mxu0 0.0
  %252 = vmatpush1.msra.mxu0 %v224
  %253 = vmatprep.subr.mxu0 0.0
  %254 = vmatpush1.msra.mxu0 %v225
  %255 = vmatprep.subr.mxu0 0.0
  %256 = vmatpush1.msra.mxu0 %v226
  %257 = vmatprep.subr.mxu0 0.0
  %258 = vmatpush1.msra.mxu0 %v227
  %259 = vmatprep.subr.mxu0 0.0
  %260 = vmatpush1.msra.mxu0 %v228
  %261 = vmatprep.subr.mxu0 0.0
  %262 = vmatpush1.msra.mxu0 %v229
  %263 = vmatprep.subr.mxu0 0.0
  %264 = vmatpush1.msra.mxu0 %v230
  %265 = vmatprep.subr.mxu0 0.0
  %266 = vmatpush1.msra.mxu0 %v231
  %267 = vmatprep.subr.mxu0 0.0
  %268 = vmatpush1.msra.mxu0 %v232
  %269 = vmatprep.subr.mxu0 0.0
  %270 = vmatpush1.msra.mxu0 %v233
  %271 = vmatprep.subr.mxu0 0.0
  %272 = vmatpush1.msra.mxu0 %v234
  %273 = vmatprep.subr.mxu0 0.0
  %274 = vmatpush1.msra.mxu0 %v235
  %275 = vmatprep.subr.mxu0 0.0
  %276 = vmatpush1.msra.mxu0 0.0
  %277 = vmatprep.subr.mxu0 0.0
  %278 = vmatpush1.msra.mxu0 0.0
  %279 = vmatprep.subr.mxu0 0.0
  %280 = vmatpush1.msra.mxu0 0.0
  %281 = vmatprep.subr.mxu0 0.0
  %282 = vmatpush1.msra.mxu0 0.0
  %283 = vmatprep.subr.mxu0 0.0
  %284 = vmatpush1.msra.mxu0 0.0
  %285 = vmatprep.subr.mxu0 0.0
  %286 = vmatpush1.msra.mxu0 0.0
  %287 = vmatprep.subr.mxu0 0.0
  %288 = vmatpush1.msra.mxu0 0.0
  %289 = vmatprep.subr.mxu0 0.0
  %290 = vmatpush1.msra.mxu0 0.0
  %291 = vmatprep.subr.mxu0 0.0
  %292 = vmatpush1.msra.mxu0 0.0
  %293 = vmatprep.subr.mxu0 0.0
  %294 = vmatpush1.msra.mxu0 0.0
  %295 = vmatprep.subr.mxu0 0.0
  %296 = vmatpush1.msra.mxu0 0.0
  %297 = vmatprep.subr.mxu0 0.0
  %298 = vmatpush1.msra.mxu0 0.0
  %299 = vmatprep.subr.mxu0 0.0
  %300 = vmatpush1.msra.mxu0 0.0
  %301 = vmatprep.subr.mxu0 0.0
  %302 = vmatpush1.msra.mxu0 0.0
  %303 = vmatprep.subr.mxu0 0.0
  %304 = vmatpush1.msra.mxu0 0.0
  %305 = vmatprep.subr.mxu0 0.0
  %306 = vmatpush1.msra.mxu0 0.0
  %307 = vmatprep.mubr.f32.mxu0 0.0
  %308 = vmatmul.mubr.f32.gmra.mrb[0].mxu0 %v204
  %v309 = vpop.f32.mrb[0].mxu0
  %v310 = vadd.f32 %v241, %v309
  %v311 = vpop.f32.mrb[0].mxu0
  %312 = vmatprep.mubr.f32.mxu0 0.0
  %313 = vmatmul.mubr.f32.gmra.mrb[0].mxu0 %v205
  %v314 = vpop.f32.mrb[0].mxu0
  %v315 = vadd.f32 %v241, %v314
  %v316 = vpop.f32.mrb[0].mxu0
  %317 = vmatprep.mubr.f32.mxu0 0.0
  %318 = vmatmul.mubr.f32.gmra.mrb[0].mxu0 %v206
  %v319 = vpop.f32.mrb[0].mxu0
  %v320 = vadd.f32 %v241, %v319
  %v321 = vpop.f32.mrb[0].mxu0
  %322 = vmatprep.mubr.f32.mxu0 0.0
  %323 = vmatmul.mubr.f32.gmra.mrb[0].mxu0 %v207
  %v324 = vpop.f32.mrb[0].mxu0
  %v325 = vadd.f32 %v241, %v324
  %v326 = vpop.f32.mrb[0].mxu0
  %327 = vmatprep.mubr.f32.mxu0 0.0
  %328 = vmatmul.mubr.f32.gmra.mrb[0].mxu0 %v208
  %v329 = vpop.f32.mrb[0].mxu0
  %v330 = vadd.f32 %v241, %v329
  %v331 = vpop.f32.mrb[0].mxu0
  %332 = vmatprep.mubr.f32.mxu0 0.0
  %333 = vmatmul.mubr.f32.gmra.mrb[0].mxu0 %v209
  %v334 = vpop.f32.mrb[0].mxu0
  %v335 = vadd.f32 %v241, %v334
  %v336 = vpop.f32.mrb[0].mxu0
  %337 = vmatprep.mubr.f32.mxu0 0.0
  %338 = vmatmul.mubr.f32.gmra.mrb[0].mxu0 %v210
  %v339 = vpop.f32.mrb[0].mxu0
  %v340 = vadd.f32 %v241, %v339
  %v341 = vpop.f32.mrb[0].mxu0
  %342 = vmatprep.mubr.f32.mxu0 0.0
  %343 = vmatmul.mubr.f32.gmra.mrb[0].mxu0 %v211
  %v344 = vpop.f32.mrb[0].mxu0
  %v345 = vadd.f32 %v241, %v344
  %v346 = vpop.f32.mrb[0].mxu0
  %347 = vmatprep.mubr.f32.mxu0 0.0
  %348 = vmatmul.mubr.f32.gmra.mrb[0].mxu0 %v212
  %v349 = vpop.f32.mrb[0].mxu0
  %v350 = vadd.f32 %v241, %v349
  %v351 = vpop.f32.mrb[0].mxu0
  %352 = vmatprep.mubr.f32.mxu0 0.0
  %353 = vmatmul.mubr.f32.gmra.mrb[0].mxu0 %v213
  %v354 = vpop.f32.mrb[0].mxu0
  %v355 = vadd.f32 %v241, %v354
  %v356 = vpop.f32.mrb[0].mxu0
  %357 = vmatprep.mubr.f32.mxu0 0.0
  %358 = vmatmul.mubr.f32.gmra.mrb[0].mxu0 %v214
  %v359 = vpop.f32.mrb[0].mxu0
  %v360 = vadd.f32 %v241, %v359
  %v361 = vpop.f32.mrb[0].mxu0
  %362 = vmatprep.mubr.f32.mxu0 0.0
  %363 = vmatmul.mubr.f32.gmra.mrb[0].mxu0 %v215
  %v364 = vpop.f32.mrb[0].mxu0
  %v365 = vadd.f32 %v241, %v364
  %v366 = vpop.f32.mrb[0].mxu0
  %367 = vmatprep.mubr.f32.mxu0 0.0
  %368 = vmatmul.mubr.f32.gmra.mrb[0].mxu0 %v216
  %v369 = vpop.f32.mrb[0].mxu0
  %v370 = vadd.f32 %v241, %v369
  %v371 = vpop.f32.mrb[0].mxu0
  %372 = vmatprep.mubr.f32.mxu0 0.0
  %373 = vmatmul.mubr.f32.gmra.mrb[0].mxu0 %v217
  %v374 = vpop.f32.mrb[0].mxu0
  %v375 = vadd.f32 %v241, %v374
  %v376 = vpop.f32.mrb[0].mxu0
  %377 = vmatprep.mubr.f32.mxu0 0.0
  %378 = vmatmul.mubr.f32.gmra.mrb[0].mxu0 %v218
  %v379 = vpop.f32.mrb[0].mxu0
  %v380 = vadd.f32 %v241, %v379
  %v381 = vpop.f32.mrb[0].mxu0
  %382 = vmatprep.mubr.f32.mxu0 0.0
  %383 = vmatmul.mubr.f32.gmra.mrb[0].mxu0 %v219
  %v384 = vpop.f32.mrb[0].mxu0
  %v385 = vadd.f32 %v241, %v384
  %v386 = vpop.f32.mrb[0].mxu0
  %387 = vdwg.mxu0
  %388 = vst [vmem:[%s5] sm:$0xff] %v310
  %389 = vst [vmem:[%s5 + $0x8] sm:$0xff] %v315
  %390 = vst [vmem:[%s5 + $0x10] sm:$0xff] %v320
  %391 = vst [vmem:[%s5 + $0x18] sm:$0xff] %v325
  %392 = vst [vmem:[%s5 + $0x20] sm:$0xff] %v330
  %393 = vst [vmem:[%s5 + $0x28] sm:$0xff] %v335
  %394 = vst [vmem:[%s5 + $0x30] sm:$0xff] %v340
  %395 = vst [vmem:[%s5 + $0x38] sm:$0xff] %v345
  %396 = vst [vmem:[%s5 + $0x40] sm:$0xff] %v350
  %397 = vst [vmem:[%s5 + $0x48] sm:$0xff] %v355
  %398 = vst [vmem:[%s5 + $0x50] sm:$0xff] %v360
  %399 = vst [vmem:[%s5 + $0x58] sm:$0xff] %v365
  %400 = vst [vmem:[%s5 + $0x60] sm:$0xff] %v370
  %401 = vst [vmem:[%s5 + $0x68] sm:$0xff] %v375
  %402 = vst [vmem:[%s5 + $0x70] sm:$0xff] %v380
  %403 = vst [vmem:[%s5 + $0x78] sm:$0xff] %v385
  // Predicated region
  $region22: #{positionwise_feed_forward.1} parent=0 // pred_check
    _
  $region23: #{positionwise_feed_forward.1} parent=0 // pred_check_branch
    %405 = sbr.rel (0) target = $region25
  $region24: #{positionwise_feed_forward.1} parent=0 // pred_region
    _
  $region25: #{positionwise_feed_forward.1} parent=0 // pred_fallthru
    _
  // Predicated region
  $region26: #{positionwise_feed_forward.1} parent=0 // pred_check
    _
  $region27: #{positionwise_feed_forward.1} parent=0 // pred_check_branch
    %407 = sbr.rel (0) target = $region29
  $region28: #{positionwise_feed_forward.1} parent=0 // pred_region
    _
  $region29: #{positionwise_feed_forward.1} parent=0 // pred_fallthru
    _

</llo_original>
